<compile_context>
chip_gen: v7x
topology: tpu7x:2x2x1
jax: 0.10.0
libtpu: 0.0.40
codegen_flags: <defaults>
</compile_context>

<pallas_src>
import jax
import jax.numpy as jnp
from jax import lax
from jax.experimental import pallas as pl
from jax.experimental.pallas import tpu as pltpu


def _round_up(x, m):
    return ((x + m - 1) // m) * m


def linear_relu_kernel(x_ref, w_ref, b_ref, o_ref):
    # x_ref: (TB, 20)  natural-layout batch slab
    # w_ref: (10, 20)  native PyTorch (out_features, in_features) layout
    # b_ref: (1, 10)
    # o_ref: (TB, 10)
    x = x_ref[...]
    w = w_ref[...]
    # y[b, o] = sum_k x[b, k] * w[o, k]  ==  x @ w.T, contracting both minor dims.
    y = lax.dot_general(
        x, w,
        dimension_numbers=(((1,), (1,)), ((), ())),
        preferred_element_type=jnp.float32,
    )
    y = y + b_ref[...]                        # (1, 10) broadcast over batch rows
    o_ref[...] = jnp.maximum(y, 0.0).astype(o_ref.dtype)


def simple_model_forward(x, w, b, *, tb_max=16384):
    """Forward of SimpleModel: relu(x @ w.T + b).

    x: (B, 20) f32, w: (10, 20) f32 (PyTorch layout), b: (10,) f32.
    Returns (B, 10) f32.
    """
    B, in_features = x.shape
    out_features = w.shape[0]
    b2 = b.reshape(1, out_features)           # tiny (40 B); for in-kernel broadcast

    if B <= 4096:
        # Single block equal to the full batch (block == full dims is always legal).
        TB = B
    else:
        # >= 2 grid steps so a v7x megacore can split the batch across both
        # TensorCores; multiple of 256 keeps sublane (8) / MXU alignment.
        TB = min(tb_max, _round_up(pl.cdiv(B, 2), 256))
    grid = (pl.cdiv(B, TB),)

    # Natural-layout blocks pad their minor dim (20 / 10) up to 128 lanes in
    # VMEM: each (TB, *) f32 buffer costs TB*128*4 bytes; 2 arrays, double-buffered.
    per_buf = TB * 128 * 4
    vmem_limit = max(4 * per_buf + (4 << 20), 16 << 20)

    cost = pl.CostEstimate(
        flops=2 * B * in_features * out_features,
        transcendentals=0,
        bytes_accessed=4 * (B * in_features + out_features * in_features
                            + out_features + B * out_features),
    )

    return pl.pallas_call(
        linear_relu_kernel,
        out_shape=jax.ShapeDtypeStruct((B, out_features), x.dtype),
        grid_spec=pltpu.PrefetchScalarGridSpec(
            num_scalar_prefetch=0,
            grid=grid,
            in_specs=[
                # x: natural-layout batch slabs (contiguous in HBM),
                # double-buffered by the Pallas pipeline.
                pl.BlockSpec((TB, in_features), lambda i: (i, 0)),
                # W / b: constant index_map -> VMEM-resident across the grid.
                pl.BlockSpec((out_features, in_features), lambda i: (0, 0)),
                pl.BlockSpec((1, out_features), lambda i: (0, 0)),
            ],
            out_specs=pl.BlockSpec((TB, out_features), lambda i: (i, 0)),
        ),
        compiler_params=pltpu.CompilerParams(
            dimension_semantics=("parallel",),
            vmem_limit_bytes=vmem_limit,
        ),
        cost_estimate=cost,
    )(x, w, b2)


if __name__ == "__main__":
    key = jax.random.PRNGKey(0)
    kx, kw, kb = jax.random.split(key, 3)

    B, IN, OUT = 8, 20, 10
    x = jax.random.normal(kx, (B, IN), dtype=jnp.float32)
    # Deterministic init mimicking nn.Linear's uniform(-1/sqrt(in), 1/sqrt(in)).
    bound = 1.0 / jnp.sqrt(jnp.float32(IN))
    w = jax.random.uniform(kw, (OUT, IN), dtype=jnp.float32,
                           minval=-bound, maxval=bound)
    b = jax.random.uniform(kb, (OUT,), dtype=jnp.float32,
                           minval=-bound, maxval=bound)

    # Small-batch path (single block equal to the full batch).
    out = simple_model_forward(x, w, b)
    jax.block_until_ready(out)
    ref = jnp.maximum(x @ w.T + b, 0.0)
    assert out.shape == (B, OUT)
    assert jnp.allclose(out, ref, atol=1e-5, rtol=1e-5)

    # Larger batch exercises the tiled path: grid of 2 "parallel" steps with a
    # partial last block (no wrapper pad / slice needed).
    B2 = 20000
    x2 = jax.random.normal(kx, (B2, IN), dtype=jnp.float32)
    out2 = simple_model_forward(x2, w, b)
    jax.block_until_ready(out2)
    ref2 = jnp.maximum(x2 @ w.T + b, 0.0)
    assert out2.shape == (B2, OUT)
    assert jnp.allclose(out2, ref2, atol=1e-5, rtol=1e-5)

    print("KERNEL_OK")
</pallas_src>

<mosaic_0001>
module attributes {stable_mosaic.version = 11 : i64} {
  func.func @linear_relu_kernel(%arg0: i32, %arg1: memref<8x20xf32, #tpu.memory_space<vmem>>, %arg2: memref<10x20xf32, #tpu.memory_space<vmem>>, %arg3: memref<1x10xf32, #tpu.memory_space<vmem>>, %arg4: memref<8x10xf32, #tpu.memory_space<vmem>>) attributes {dimension_semantics = [#tpu.dimension_semantics<parallel>], iteration_bounds = array<i64: 1>, scalar_prefetch = 0 : i64, scratch_operands = 0 : i64, tpu.core_type = #tpu.core_type<tc>, window_params = [{transform_indices = @transform_0, window_bounds = array<i64: 8, 20>}, {pipeline_mode = #tpu.pipeline_mode<synchronous>, transform_indices = @transform_1, window_bounds = array<i64: 10, 20>}, {pipeline_mode = #tpu.pipeline_mode<synchronous>, transform_indices = @transform_2, window_bounds = array<i64: 1, 10>}, {transform_indices = @transform_3, window_bounds = array<i64: 8, 10>}]} {
    %c0 = arith.constant 0 : index
    %c0_0 = arith.constant 0 : index
    %0 = vector.load %arg1[%c0, %c0_0] : memref<8x20xf32, #tpu.memory_space<vmem>>, vector<8x20xf32>
    %c0_1 = arith.constant 0 : index
    %c0_2 = arith.constant 0 : index
    %1 = vector.load %arg2[%c0_1, %c0_2] : memref<10x20xf32, #tpu.memory_space<vmem>>, vector<10x20xf32>
    %cst = arith.constant dense<0.000000e+00> : vector<8x10xf32>
    %2 = tpu.matmul %0, %1, %cst {dimension_numbers = #tpu.dot_dimension_numbers<[1], [1], [0], [0], [0, 0, 1, 0], [], []>} : vector<8x20xf32>, vector<10x20xf32>, vector<8x10xf32> -> vector<8x10xf32>
    %c0_3 = arith.constant 0 : index
    %c0_4 = arith.constant 0 : index
    %3 = vector.load %arg3[%c0_3, %c0_4] : memref<1x10xf32, #tpu.memory_space<vmem>>, vector<1x10xf32>
    %4 = vector.broadcast %3 : vector<1x10xf32> to vector<8x10xf32>
    %5 = arith.addf %2, %4 : vector<8x10xf32>
    %cst_5 = arith.constant 0.000000e+00 : f32
    %6 = vector.broadcast %cst_5 : f32 to vector<8x10xf32>
    %7 = arith.maximumf %5, %6 : vector<8x10xf32>
    %c0_6 = arith.constant 0 : index
    %c0_7 = arith.constant 0 : index
    %8 = vector.load %arg4[%c0_6, %c0_7] : memref<8x10xf32, #tpu.memory_space<vmem>>, vector<8x10xf32>
    tpu.vector_store %arg4[%c0_6, %c0_7], %7 {strides = array<i32>} : memref<8x10xf32, #tpu.memory_space<vmem>>, vector<8x10xf32>,
    return
  }
  func.func @transform_0(%arg0: i32) -> (i32, i32) {
    %c0_i32 = arith.constant 0 : i32
    %c0_i32_0 = arith.constant 0 : i32
    return %arg0, %c0_i32 : i32, i32
  }
  func.func @transform_1(%arg0: i32) -> (i32, i32) {
    %c0_i32 = arith.constant 0 : i32
    %c0_i32_0 = arith.constant 0 : i32
    %c0_i32_1 = arith.constant 0 : i32
    return %c0_i32, %c0_i32_0 : i32, i32
  }
  func.func @transform_2(%arg0: i32) -> (i32, i32) {
    %c0_i32 = arith.constant 0 : i32
    %c0_i32_0 = arith.constant 0 : i32
    %c0_i32_1 = arith.constant 0 : i32
    return %c0_i32, %c0_i32_0 : i32, i32
  }
  func.func @transform_3(%arg0: i32) -> (i32, i32) {
    %c0_i32 = arith.constant 0 : i32
    %c0_i32_0 = arith.constant 0 : i32
    return %arg0, %c0_i32 : i32, i32
  }
}

</mosaic_0001>

<llo_original>
// kernel: tpu_custom_call.1
$region0: #{tpu_custom_call.1}
  #allocation0 [shape = 'u32[]', space=smem, size = 0x4, offset = 0x4, fixed_abs, tag = 'smem constant byte address 0x4 - core index']
  #allocation1 [shape = 'u32[144,128]{1,0:T(1,128)}', space=vmem, size = 0x12000, scoped, tag = 'internal scratch']
  %s0 = inlined_call_operand.hbm [shape: f32[8,20], index: 0, kind: input, shape index: {}]
  %s1 = inlined_call_operand.hbm [shape: f32[10,20], index: 1, kind: input, shape index: {}]
  %s2 = inlined_call_operand.vmem [shape: f32[1,10], index: 2, kind: input, shape index: {}]
  %s3 = inlined_call_operand.hbm [shape: f32[8,10], index: 3, kind: output, shape index: {}]
  %s4 = sld [smem:[#allocation0]]
  $region30: #{tpu_custom_call.1} parent=0
    _
  %s6 = ssub.s32 1, %s4
  %s7 = scalar_select 0, %s6, %s4
  $region1: #{tpu_custom_call.1} parent=0
    #allocation2 [shape = 'u8[4096]{0}', space=vmem, size = 0x1000, scoped, tag = 'input window, operand 0, single buffered']
    #allocation3 [shape = 's32[1]{0}', space=sflag, size = 0x4, scoped, tag = 'scoped memory for tpu_custom_call.1']
    #allocation4 [shape = 's32[1]{0}', space=sflag, size = 0x4, scoped, tag = 'scoped memory for tpu_custom_call.1']
    #allocation5 [shape = 'u8[8192]{0}', space=vmem, size = 0x2000, scoped, tag = 'input window, operand 1, single buffered']
    #allocation6 [shape = 's32[1]{0}', space=sflag, size = 0x4, scoped, tag = 'scoped memory for tpu_custom_call.1']
    #allocation7 [shape = 'u8[4096]{0}', space=vmem, size = 0x1000, scoped, tag = 'output window, operand 0, single buffered']
    %8 = vsyncpa [#allocation3], 0
    %9 = vsyncpa [#allocation6], 0
    %10 = vsyncpa [#allocation4], 0
    // Predicated region
    $region2: #{tpu_custom_call.1} parent=1 // pred_check
      _
    $region3: #{tpu_custom_call.1} parent=1 // pred_check_branch
      %12 = sbr.rel (0) target = $region5
    $region4: #{tpu_custom_call.1} parent=1 // pred_region
      %s14 = ssub.s32 128, 128
      %15 = vsyncadd [#allocation3], %s14
      %s17 = sshll.u32 [#allocation2], 4
      %s18 = int_to_ptr.vmem [resolvable:$true] %s17
      %20 = dma.hbm_to_vmem [thread:$0]  %s0, 128, %s18, [#allocation3]
    $region5: #{tpu_custom_call.1} parent=1 // pred_fallthru
      _
    // Predicated region
    $region6: #{tpu_custom_call.1} parent=1 // pred_check
      _
    $region7: #{tpu_custom_call.1} parent=1 // pred_check_branch
      %22 = sbr.rel (0) target = $region9
    $region8: #{tpu_custom_call.1} parent=1 // pred_region
      %s24 = ssub.s32 256, 256
      %25 = vsyncadd [#allocation6], %s24
      %s26 = sshll.u32 [#allocation5], 4
      %s27 = int_to_ptr.vmem [resolvable:$true] %s26
      %32 = dma.hbm_to_vmem [thread:$0]  %s1, 256, %s27, [#allocation6], 128, 128, 8
    $region9: #{tpu_custom_call.1} parent=1 // pred_fallthru
      _
    // Predicated region
    $region10: #{tpu_custom_call.1} parent=1 // pred_check
      _
    $region11: #{tpu_custom_call.1} parent=1 // pred_check_branch
      %34 = sbr.rel (0) target = $region13
    $region12: #{tpu_custom_call.1} parent=1 // pred_region
      _
    $region13: #{tpu_custom_call.1} parent=1 // pred_fallthru
      _
    // Predicated region
    $region14: #{tpu_custom_call.1} parent=1 // pred_check
      _
    $region15: #{tpu_custom_call.1} parent=1 // pred_check_branch
      %36 = sbr.rel (0) target = $region17
    $region16: #{tpu_custom_call.1} parent=1 // pred_region
      %37 = dma.done [#allocation3], 128
    $region17: #{tpu_custom_call.1} parent=1 // pred_fallthru
      _
    // Predicated region
    $region18: #{tpu_custom_call.1} parent=1 // pred_check
      _
    $region19: #{tpu_custom_call.1} parent=1 // pred_check_branch
      %39 = sbr.rel (0) target = $region21
    $region20: #{tpu_custom_call.1} parent=1 // pred_region
      %40 = dma.done [#allocation6], 256
    $region21: #{tpu_custom_call.1} parent=1 // pred_fallthru
      _
    %v41 = vld [vmem:[#allocation2] sm:$0xff]
    %v42 = vld [vmem:[#allocation5] sm:$0xff]
    %v43 = vld [vmem:[#allocation5 + $0x8] sm:$0x3]
    %v44 = vld [vmem:[%s2] sm:$0x1]
    %v46 = vlaneseq
    %v47 = vshrl.u32 %v46, 7
    %v48 = vsub.s32 0, %v47
    %v49 = vrot.slane %v44, %v48
    %vm51 = vcmask 162816
    %v53 = vsel %vm51, %v41, 0
    %v56 = vsel %vm51, %v42, 0
    %v59 = vsel %vm51, %v43, 0
    %61 = vmatprep.subr.mxu0 0.0
    %62 = vmatpush1.xpose.msra.mxu0 %v56
    %63 = vmatprep.subr.mxu0 0.0
    %64 = vmatpush1.xpose.msra.mxu0 %v59
    %65 = vmatprep.subr.mxu0 0.0
    %66 = vmatpush1.xpose.msra.mxu0 0.0
    %67 = vmatprep.subr.mxu0 0.0
    %68 = vmatpush1.xpose.msra.mxu0 0.0
    %69 = vmatprep.subr.mxu0 0.0
    %70 = vmatpush1.xpose.msra.mxu0 0.0
    %71 = vmatprep.subr.mxu0 0.0
    %72 = vmatpush1.xpose.msra.mxu0 0.0
    %73 = vmatprep.subr.mxu0 0.0
    %74 = vmatpush1.xpose.msra.mxu0 0.0
    %75 = vmatprep.subr.mxu0 0.0
    %76 = vmatpush1.xpose.msra.mxu0 0.0
    %77 = vmatprep.subr.mxu0 0.0
    %78 = vmatpush1.xpose.msra.mxu0 0.0
    %79 = vmatprep.subr.mxu0 0.0
    %80 = vmatpush1.xpose.msra.mxu0 0.0
    %81 = vmatprep.subr.mxu0 0.0
    %82 = vmatpush1.xpose.msra.mxu0 0.0
    %83 = vmatprep.subr.mxu0 0.0
    %84 = vmatpush1.xpose.msra.mxu0 0.0
    %85 = vmatprep.subr.mxu0 0.0
    %86 = vmatpush1.xpose.msra.mxu0 0.0
    %87 = vmatprep.subr.mxu0 0.0
    %88 = vmatpush1.xpose.msra.mxu0 0.0
    %89 = vmatprep.subr.mxu0 0.0
    %90 = vmatpush1.xpose.msra.mxu0 0.0
    %91 = vmatprep.subr.mxu0 0.0
    %92 = vmatpush1.xpose.msra.mxu0 0.0
    %93 = vmatprep.subr.mxu0 0.0
    %94 = vmatpush1.xpose.msra.mxu0 0.0
    %95 = vmatprep.subr.mxu0 0.0
    %96 = vmatpush1.xpose.msra.mxu0 0.0
    %97 = vmatprep.subr.mxu0 0.0
    %98 = vmatpush1.xpose.msra.mxu0 0.0
    %99 = vmatprep.subr.mxu0 0.0
    %100 = vmatpush1.xpose.msra.mxu0 0.0
    %101 = vmatprep.subr.mxu0 0.0
    %102 = vmatpush1.xpose.msra.mxu0 0.0
    %103 = vmatprep.subr.mxu0 0.0
    %104 = vmatpush1.xpose.msra.mxu0 0.0
    %105 = vmatprep.subr.mxu0 0.0
    %106 = vmatpush1.xpose.msra.mxu0 0.0
    %107 = vmatprep.subr.mxu0 0.0
    %108 = vmatpush1.xpose.msra.mxu0 0.0
    %109 = vmatprep.subr.mxu0 0.0
    %110 = vmatpush1.xpose.msra.mxu0 0.0
    %111 = vmatprep.subr.mxu0 0.0
    %112 = vmatpush1.xpose.msra.mxu0 0.0
    %113 = vmatprep.subr.mxu0 0.0
    %114 = vmatpush1.xpose.msra.mxu0 0.0
    %115 = vmatprep.subr.mxu0 0.0
    %116 = vmatpush1.xpose.msra.mxu0 0.0
    %117 = vmatprep.subr.mxu0 0.0
    %118 = vmatpush1.xpose.msra.mxu0 0.0
    %119 = vmatprep.subr.mxu0 0.0
    %120 = vmatpush1.xpose.msra.mxu0 0.0
    %121 = vmatprep.subr.mxu0 0.0
    %122 = vmatpush1.xpose.msra.mxu0 0.0
    %123 = vmatprep.subr.mxu0 0.0
    %124 = vmatpush1.xpose.msra.mxu0 0.0
    %125 = vmatprep.mubr.f32.mxu0 0.0
    %126 = vmatmul.mubr.f32.gmra.mrb[0].mxu0 %v53
    %v127 = vpop.f32.mrb[0].mxu0
    %v128 = vadd.f32 %v49, %v127
    %v129 = vpop.f32.mrb[0].mxu0
    %130 = vdwg.mxu0
    %v131 = vmax.f32 %v128, 0.0
    %vm132 = vcmask 80896
    %133 = vst.msk [vmem:[#allocation7] sm:$0xff] %vm132, %v131
    // Predicated region
    $region22: #{tpu_custom_call.1} parent=1 // pred_check
      _
    $region23: #{tpu_custom_call.1} parent=1 // pred_check_branch
      %135 = sbr.rel (0) target = $region25
    $region24: #{tpu_custom_call.1} parent=1 // pred_region
      %s137 = ssub.s32 128, 128
      %138 = vsyncadd [#allocation4], %s137
      %s140 = sshll.u32 [#allocation7], 4
      %s141 = int_to_ptr.vmem [resolvable:$true] %s140
      %143 = dma.vmem_to_hbm [thread:$0]  %s141, 128, %s3, [#allocation4]
    $region25: #{tpu_custom_call.1} parent=1 // pred_fallthru
      _
    // Predicated region
    $region26: #{tpu_custom_call.1} parent=1 // pred_check
      _
    $region27: #{tpu_custom_call.1} parent=1 // pred_check_branch
      %145 = sbr.rel (0) target = $region29
    $region28: #{tpu_custom_call.1} parent=1 // pred_region
      %146 = dma.done [#allocation4], 128
    $region29: #{tpu_custom_call.1} parent=1 // pred_fallthru
      _
    %147 = vsyncpa [#allocation3], 1
    %148 = vsyncpa [#allocation6], 1
    %149 = vsyncpa [#allocation4], 1

</llo_original>
